<compile_context>
chip_gen: v5e
topology: v5e:2x2
jax: 0.10.0
libtpu: 0.0.40
codegen_flags: <defaults>
</compile_context>

<pallas_src>
import jax
import jax.numpy as jnp
from jax.experimental import pallas as pl
from jax.experimental.pallas import tpu as pltpu

_IN_FEATURES = 28 * 28      # 784
_OUT_FEATURES = 10
_MAX_BATCH_TILE = 1024      # f32: ~3.1 MiB x-tile x2 (double buffer) + ~1.4 MiB misc
_TARGET_GRID_STEPS = 4      # >= 2 steps per TensorCore on v7x when n is large enough


def _cdiv(a, b):
    return -(-a // b)


def _round_up(x, m):
    return ((x + m - 1) // m) * m


def _choose_batch_tile(n):
    """Batch tile: multiple of 8 sublanes, >= _TARGET_GRID_STEPS steps when
    possible, capped for VMEM.  No padding is ever applied to x; the last
    grid block may be ragged and Pallas masks the corresponding output rows."""
    if n <= 8:
        return n                      # block dim == full array dim -> legal
    tn = _round_up(_cdiv(n, _TARGET_GRID_STEPS), 8)
    return max(8, min(tn, _MAX_BATCH_TILE))


def _fused_affine_kernel(x_ref, w_ref, b_ref, o_ref):
    """One batch tile of o = x @ W_fused + b_fused.

    x_ref: (TN, 784)  w_ref: (784, 10)  b_ref: (1, 10)  o_ref: (TN, 10)
    """
    acc = jnp.dot(x_ref[...], w_ref[...], preferred_element_type=jnp.float32)
    o_ref[...] = (acc + b_ref[...]).astype(o_ref.dtype)


def prepare_params(params):
    """Fold the three Linear layers into one affine map, done ONCE (not per call).

    Valid only because Net has no nonlinearities between the Linear layers.
    Returns (w_fused, b_fused): w (784, 10) f32, b (1, 10) f32.
    """
    (w1, b1), (w2, b2), (w3, b3) = params
    w1t = w1.T.astype(jnp.float32)           # (784, 80)
    w2t = w2.T.astype(jnp.float32)           # (80, 16)
    w3t = w3.T.astype(jnp.float32)           # (16, 10)
    w_fused = (w1t @ w2t) @ w3t              # (784, 10)
    b_fused = (b1 @ w2t + b2) @ w3t + b3     # (10,)
    return w_fused, b_fused.reshape(1, _OUT_FEATURES)


@jax.jit
def net_forward(x_nchw, w_fused, b_fused):
    """Forward pass matching PyTorch Net. x_nchw: (N, 1, 28, 28) float32."""
    n = x_nchw.shape[0]
    # nn.Flatten on NCHW -> (N, C*H*W) row-major.
    x_flat = x_nchw.reshape(n, -1).astype(jnp.float32)

    tn = _choose_batch_tile(n)
    grid = (pl.cdiv(n, tn),)   # ragged last block handled by Pallas (no jnp.pad pass)

    out = pl.pallas_call(
        _fused_affine_kernel,
        out_shape=jax.ShapeDtypeStruct((n, _OUT_FEATURES), jnp.float32),
        grid_spec=pl.GridSpec(
            grid=grid,
            in_specs=[
                # x: batch-tiled -> double-buffered DMA overlaps the MXU.
                pl.BlockSpec((tn, _IN_FEATURES), lambda i: (i, 0)),
                # fused weight / bias: constant block index -> VMEM-resident.
                pl.BlockSpec((_IN_FEATURES, _OUT_FEATURES), lambda i: (0, 0)),
                pl.BlockSpec((1, _OUT_FEATURES), lambda i: (0, 0)),
            ],
            # Narrow (tn, 10) output: 10 == full last dim, so this is legal and
            # avoids writing 512 B/row of which only 40 B are useful.
            out_specs=pl.BlockSpec((tn, _OUT_FEATURES), lambda i: (i, 0)),
        ),
        compiler_params=pltpu.CompilerParams(
            # Batch tiles are independent -> shard across both v7x TensorCores.
            dimension_semantics=("parallel",),
        ),
        cost_estimate=pl.CostEstimate(
            flops=2 * n * _IN_FEATURES * _OUT_FEATURES,
            transcendentals=0,
            bytes_accessed=4 * (n * _IN_FEATURES
                                + _IN_FEATURES * _OUT_FEATURES
                                + _OUT_FEATURES
                                + n * _OUT_FEATURES),
        ),
    )(x_flat, w_fused, b_fused)
    return out


def init_params(key):
    """Deterministic init with PyTorch nn.Linear-style uniform(+-1/sqrt(fan_in))."""
    dims = [(28 * 28, 80), (80, 16), (16, 10)]
    params = []
    for (fan_in, fan_out) in dims:
        key, kw, kb = jax.random.split(key, 3)
        bound = 1.0 / (fan_in ** 0.5)
        w = jax.random.uniform(kw, (fan_out, fan_in), jnp.float32, -bound, bound)
        b = jax.random.uniform(kb, (fan_out,), jnp.float32, -bound, bound)
        params.append((w, b))
    return params


def reference_forward(x_nchw, params):
    """Pure-JAX reference reproducing the (unfused) PyTorch semantics."""
    (w1, b1), (w2, b2), (w3, b3) = params
    h = x_nchw.reshape(x_nchw.shape[0], -1)
    h = h @ w1.T + b1
    h = h @ w2.T + b2
    h = h @ w3.T + b3
    return h


if __name__ == "__main__":
    key = jax.random.PRNGKey(0)
    key, kx = jax.random.split(key)

    # MNIST-like input, NCHW.  Batch deliberately NOT a multiple of the tile
    # (13 -> tile 8, grid 2, ragged last block) to exercise the unpadded path.
    n = 13
    x = jax.random.normal(kx, (n, 1, 28, 28), dtype=jnp.float32)
    params = init_params(key)

    # Hoisted out of the per-call path (done once for any number of forward calls).
    w_fused, b_fused = prepare_params(params)

    out = net_forward(x, w_fused, b_fused)
    out = jax.block_until_ready(out)

    ref = reference_forward(x, params)
    assert out.shape == (n, 10), out.shape
    # Slightly looser than 1e-4: the algebraic 3->1 GEMM fusion reorders the
    # f32 summation, which perturbs results at the ~1e-6 .. 1e-5 level.
    assert jnp.allclose(out, ref, atol=1e-3, rtol=1e-3), "mismatch vs reference"

    print("KERNEL_OK")
</pallas_src>

<mosaic_0001>
module attributes {stable_mosaic.version = 11 : i64} {
  func.func @_fused_affine_kernel(%arg0: i32, %arg1: memref<8x784xf32, #tpu.memory_space<vmem>>, %arg2: memref<784x10xf32, #tpu.memory_space<vmem>>, %arg3: memref<1x10xf32, #tpu.memory_space<vmem>>, %arg4: memref<8x10xf32, #tpu.memory_space<vmem>>) attributes {dimension_semantics = [#tpu.dimension_semantics<parallel>], iteration_bounds = array<i64: 2>, scalar_prefetch = 0 : i64, scratch_operands = 0 : i64, tpu.core_type = #tpu.core_type<tc>, window_params = [{transform_indices = @transform_0, window_bounds = array<i64: 8, 784>}, {pipeline_mode = #tpu.pipeline_mode<synchronous>, transform_indices = @transform_1, window_bounds = array<i64: 784, 10>}, {pipeline_mode = #tpu.pipeline_mode<synchronous>, transform_indices = @transform_2, window_bounds = array<i64: 1, 10>}, {transform_indices = @transform_3, window_bounds = array<i64: 8, 10>}]} {
    %c0 = arith.constant 0 : index
    %c0_0 = arith.constant 0 : index
    %0 = vector.load %arg1[%c0, %c0_0] : memref<8x784xf32, #tpu.memory_space<vmem>>, vector<8x784xf32>
    %c0_1 = arith.constant 0 : index
    %c0_2 = arith.constant 0 : index
    %1 = vector.load %arg2[%c0_1, %c0_2] : memref<784x10xf32, #tpu.memory_space<vmem>>, vector<784x10xf32>
    %cst = arith.constant dense<0.000000e+00> : vector<8x10xf32>
    %2 = tpu.matmul %0, %1, %cst {dimension_numbers = #tpu.dot_dimension_numbers<[1], [0], [0], [1], [0, 0, 1, 1], [], []>} : vector<8x784xf32>, vector<784x10xf32>, vector<8x10xf32> -> vector<8x10xf32>
    %c0_3 = arith.constant 0 : index
    %c0_4 = arith.constant 0 : index
    %3 = vector.load %arg3[%c0_3, %c0_4] : memref<1x10xf32, #tpu.memory_space<vmem>>, vector<1x10xf32>
    %4 = vector.broadcast %3 : vector<1x10xf32> to vector<8x10xf32>
    %5 = arith.addf %2, %4 : vector<8x10xf32>
    %c0_5 = arith.constant 0 : index
    %c0_6 = arith.constant 0 : index
    %6 = vector.load %arg4[%c0_5, %c0_6] : memref<8x10xf32, #tpu.memory_space<vmem>>, vector<8x10xf32>
    tpu.vector_store %arg4[%c0_5, %c0_6], %5 {strides = array<i32>} : memref<8x10xf32, #tpu.memory_space<vmem>>, vector<8x10xf32>,
    return
  }
  func.func @transform_0(%arg0: i32) -> (i32, i32) {
    %c0_i32 = arith.constant 0 : i32
    %c0_i32_0 = arith.constant 0 : i32
    return %arg0, %c0_i32 : i32, i32
  }
  func.func @transform_1(%arg0: i32) -> (i32, i32) {
    %c0_i32 = arith.constant 0 : i32
    %c0_i32_0 = arith.constant 0 : i32
    %c0_i32_1 = arith.constant 0 : i32
    return %c0_i32, %c0_i32_0 : i32, i32
  }
  func.func @transform_2(%arg0: i32) -> (i32, i32) {
    %c0_i32 = arith.constant 0 : i32
    %c0_i32_0 = arith.constant 0 : i32
    %c0_i32_1 = arith.constant 0 : i32
    return %c0_i32, %c0_i32_0 : i32, i32
  }
  func.func @transform_3(%arg0: i32) -> (i32, i32) {
    %c0_i32 = arith.constant 0 : i32
    %c0_i32_0 = arith.constant 0 : i32
    return %arg0, %c0_i32 : i32, i32
  }
}

</mosaic_0001>

<llo_original>
// kernel: net_forward.1
$region0: #{net_forward.1}
  #allocation0 [shape = 'u32[]', space=smem, size = 0x4, offset = 0x4, fixed_abs, tag = 'smem constant byte address 0x4 - core index']
  #allocation1 [shape = 'u32[72,128]{1,0:T(1,128)}', space=vmem, size = 0x9000, scoped, tag = 'internal scratch']
  %s0 = inlined_call_operand.vmem [shape: f32[13,784], index: 0, kind: input, shape index: {}]
  %s1 = inlined_call_operand.vmem [shape: f32[784,10], index: 1, kind: input, shape index: {}]
  %s2 = inlined_call_operand.vmem [shape: f32[1,10], index: 2, kind: input, shape index: {}]
  %s3 = inlined_call_operand.hbm [shape: f32[13,10], index: 3, kind: output, shape index: {}]
  %s4 = sld [smem:[#allocation0]]
  $region45: #{net_forward.1} parent=0
    _
  %s6 = ssub.s32 1, %s4
  %s7 = scalar_select 0, %s6, %s4
  $region1: #{net_forward.1} parent=0
    #allocation2 [shape = 'u8[8192]{0}', space=vmem, size = 0x2000, scoped, tag = 'output window, operand 0']
    #allocation3 [shape = 's32[2]{0}', space=sflag, size = 0x8, scoped, tag = 'scoped memory for net_forward.1']
    %8 = vsyncpa [#allocation3], 0
    %s9 = scalar_lea.sflag [#allocation3], 1
    %10 = vsyncpa %s9, 0
    loop: start=0, step=1, limit=4
    $region2: #{net_forward.1} parent=1 // loop_pre_header
      _
    $region3: #{net_forward.1} parent=1 // loop_header
      %s12 = sphi 0, %s16
      %p13 = scmp.ge.s32.totalorder %s12, 4
      %s22 = sphi 0, %s24
      %s25 = sphi 0, %s22
      %s26 = sphi 0, %s25
      %s42 = sphi 0, %s26
      %s46 = sphi 0, %s46
      %s48 = sphi 0, %s46
      %s49 = sphi 0, %s48
      %s63 = sphi 0, %s49
      %s67 = sphi 0, %s67
      %s69 = sphi 0, %s67
      %s70 = sphi 0, %s69
      %s84 = sphi 0, %s70
      %s90 = sphi 0, %s92
      %s93 = sphi 0, %s90
      %s94 = sphi 0, %s93
      %s110 = sphi 0, %s94
    $region4: #{net_forward.1} parent=1 // loop_header_branch
      %15 = sbr.rel (%p13) target = $region8
    $region5: #{net_forward.1} parent=1 // loop_body
      %s17 = ssub.s32 %s12, 1
      %s18 = ssub.s32 %s12, 2
      %s19 = sadd.s32 %s12, 1
      %s20 = ssub.s32 %s12, %s19
      %p21 = scmp.eq.s32.totalorder %s20, 0
      %s23 = sadd.s32 %s22, 1
      %s24 = scalar_select %p21, %s22, %s23
      %p27 = pneg %p21
      %p28 = scmp.eq.s32.totalorder %s12, 1
      %p29 = por %p27, %p28
      %p30 = scmp.ne.s32.totalorder %s22, %s25
      %p31 = scmp.eq.s32.totalorder %s12, 0
      %p32 = por %p30, %p31
      %p33 = scmp.ne.s32.totalorder %s22, %s25
      %p34 = scmp.eq.s32.totalorder %s17, 1
      %p35 = por %p33, %p34
      %p36 = scmp.ne.s32.totalorder %s25, %s26
      %p37 = scmp.eq.s32.totalorder %s17, 0
      %p38 = por %p36, %p37
      %p39 = scmp.ne.s32.totalorder %s25, %s26
      %p40 = scmp.eq.s32.totalorder %s18, 1
      %p41 = por %p39, %p40
      %p43 = scmp.ne.s32.totalorder %s26, %s42
      %p44 = scmp.eq.s32.totalorder %s18, 0
      %p45 = por %p43, %p44
      %s47 = sadd.s32 %s46, 1
      %p50 = scmp.eq.s32.totalorder %s12, 1
      %p51 = scmp.ne.s32.totalorder %s46, %s48
      %p52 = scmp.eq.s32.totalorder %s12, 0
      %p53 = por %p51, %p52
      %p54 = scmp.ne.s32.totalorder %s46, %s48
      %p55 = scmp.eq.s32.totalorder %s17, 1
      %p56 = por %p54, %p55
      %p57 = scmp.ne.s32.totalorder %s48, %s49
      %p58 = scmp.eq.s32.totalorder %s17, 0
      %p59 = por %p57, %p58
      %p60 = scmp.ne.s32.totalorder %s48, %s49
      %p61 = scmp.eq.s32.totalorder %s18, 1
      %p62 = por %p60, %p61
      %p64 = scmp.ne.s32.totalorder %s49, %s63
      %p65 = scmp.eq.s32.totalorder %s18, 0
      %p66 = por %p64, %p65
      %s68 = sadd.s32 %s67, 1
      %p71 = scmp.eq.s32.totalorder %s12, 1
      %p72 = scmp.ne.s32.totalorder %s67, %s69
      %p73 = scmp.eq.s32.totalorder %s12, 0
      %p74 = por %p72, %p73
      %p75 = scmp.ne.s32.totalorder %s67, %s69
      %p76 = scmp.eq.s32.totalorder %s17, 1
      %p77 = por %p75, %p76
      %p78 = scmp.ne.s32.totalorder %s69, %s70
      %p79 = scmp.eq.s32.totalorder %s17, 0
      %p80 = por %p78, %p79
      %p81 = scmp.ne.s32.totalorder %s69, %s70
      %p82 = scmp.eq.s32.totalorder %s18, 1
      %p83 = por %p81, %p82
      %p85 = scmp.ne.s32.totalorder %s70, %s84
      %p86 = scmp.eq.s32.totalorder %s18, 0
      %p87 = por %p85, %p86
      %s88 = ssub.s32 %s12, %s19
      %p89 = scmp.eq.s32.totalorder %s88, 0
      %s91 = sadd.s32 %s90, 1
      %s92 = scalar_select %p89, %s90, %s91
      %p95 = pneg %p89
      %p96 = scmp.eq.s32.totalorder %s12, 1
      %p97 = por %p95, %p96
      %p98 = scmp.ne.s32.totalorder %s90, %s93
      %p99 = scmp.eq.s32.totalorder %s12, 0
      %p100 = por %p98, %p99
      %p101 = scmp.ne.s32.totalorder %s90, %s93
      %p102 = scmp.eq.s32.totalorder %s17, 1
      %p103 = por %p101, %p102
      %p104 = scmp.ne.s32.totalorder %s93, %s94
      %p105 = scmp.eq.s32.totalorder %s17, 0
      %p106 = por %p104, %p105
      %p107 = scmp.ne.s32.totalorder %s93, %s94
      %p108 = scmp.eq.s32.totalorder %s18, 1
      %p109 = por %p107, %p108
      %p111 = scmp.ne.s32.totalorder %s94, %s110
      %p112 = scmp.eq.s32.totalorder %s18, 0
      %p113 = por %p111, %p112
      %p114 = scmp.le.s32.totalorder 1, %s12
      %p115 = scmp.lt.s32.totalorder %s12, 3
      %p116 = pnand %p114, %p115
      %p117 = pneg %p116
      // Predicated region
      $region9: #{net_forward.1} parent=5 // pred_check
        _
      $region10: #{net_forward.1} parent=5 // pred_check_branch
        %119 = sbr.rel (%p116) target = $region12
      $region11: #{net_forward.1} parent=5 // pred_region
        %s120 = ssub.s32 %s12, 1
        // Predicated region
        $region13: #{net_forward.1} parent=11 // pred_check
          %p121 = pneg %p59
        $region14: #{net_forward.1} parent=11 // pred_check_branch
          %123 = sbr.rel (%p121) target = $region16
        $region15: #{net_forward.1} parent=11 // pred_region
          _
        $region16: #{net_forward.1} parent=11 // pred_fallthru
          _
        // Predicated region
        $region17: #{net_forward.1} parent=11 // pred_check
          %p124 = pneg %p80
        $region18: #{net_forward.1} parent=11 // pred_check_branch
          %126 = sbr.rel (%p124) target = $region20
        $region19: #{net_forward.1} parent=11 // pred_region
          _
        $region20: #{net_forward.1} parent=11 // pred_fallthru
          _
      $region12: #{net_forward.1} parent=5 // pred_fallthru
        _
      %p127 = scmp.lt.s32.totalorder %s12, 2
      // Predicated region
      $region21: #{net_forward.1} parent=5 // pred_check
        %p128 = pneg %p127
      $region22: #{net_forward.1} parent=5 // pred_check_branch
        %130 = sbr.rel (%p128) target = $region24
      $region23: #{net_forward.1} parent=5 // pred_region
        // Predicated region
        $region25: #{net_forward.1} parent=23 // pred_check
          %p131 = pneg %p32
        $region26: #{net_forward.1} parent=23 // pred_check_branch
          %133 = sbr.rel (%p131) target = $region28
        $region27: #{net_forward.1} parent=23 // pred_region
          %p134 = scmp.lt.s32.totalorder %s12, 1
          %s135 = scalar_select %p134, %s12, 1
          %s136 = smul.addr %s135, 7
          %s137 = smul.addr %s136, 8
          %s138 = scalar_lea.vmem %s0, %s137
        $region28: #{net_forward.1} parent=23 // pred_fallthru
          _
      $region24: #{net_forward.1} parent=5 // pred_fallthru
        _
      %p139 = scmp.le.s32.totalorder 1, %s12
      %p140 = scmp.lt.s32.totalorder %s12, 3
      %p141 = pnand %p139, %p140
      %p142 = pneg %p141
      // Predicated region
      $region29: #{net_forward.1} parent=5 // pred_check
        _
      $region30: #{net_forward.1} parent=5 // pred_check_branch
        %144 = sbr.rel (%p141) target = $region32
      $region31: #{net_forward.1} parent=5 // pred_region
        %s145 = ssub.s32 %s12, 1
        %p146 = scmp.lt.s32.totalorder %s17, 1
        %s147 = scalar_select %p146, %s17, 1
        %s148 = smul.addr %s147, 7
        %s149 = smul.addr %s148, 8
        %s150 = scalar_lea.vmem %s0, %s149
        %p151 = pneg %p38
        %p152 = pneg %p35
        %p153 = pneg %p59
        %p154 = pneg %p56
        %p155 = pneg %p80
        %p156 = pneg %p77
        %p157 = pneg %p106
        %p158 = pneg %p103
        %s159 = sand.u32 %s93, 1
        %s160 = scalar_lea.sflag [#allocation3], %s159
        %s161 = sand.u32 %s93, 1
        %s162 = smul.addr %s161, 8
        %s163 = scalar_lea.vmem [#allocation2], %s162
        %p164 = scmp.lt.s32.totalorder %s17, 1
        %s165 = scalar_select %p164, %s17, 1
        %s166 = smul.addr %s165, 7
        %s167 = smul.addr %s166, 8
        %s168 = scalar_lea.vmem %s0, %s167
        %v169 = vld [vmem:[%s168] sm:$0xff]
        %v170 = vld [vmem:[%s168 + $0x8] sm:$0xff]
        %v171 = vld [vmem:[%s168 + $0x10] sm:$0xff]
        %v172 = vld [vmem:[%s168 + $0x18] sm:$0xff]
        %v173 = vld [vmem:[%s168 + $0x20] sm:$0xff]
        %v174 = vld [vmem:[%s168 + $0x28] sm:$0xff]
        %v175 = vld [vmem:[%s168 + $0x30] sm:$0xff]
        %v176 = vld [vmem:[%s1] sm:$0xff]
        %v177 = vld [vmem:[%s1 + $0x8] sm:$0xff]
        %v178 = vld [vmem:[%s1 + $0x10] sm:$0xff]
        %v179 = vld [vmem:[%s1 + $0x18] sm:$0xff]
        %v180 = vld [vmem:[%s1 + $0x20] sm:$0xff]
        %v181 = vld [vmem:[%s1 + $0x28] sm:$0xff]
        %v182 = vld [vmem:[%s1 + $0x30] sm:$0xff]
        %v183 = vld [vmem:[%s1 + $0x38] sm:$0xff]
        %v184 = vld [vmem:[%s1 + $0x40] sm:$0xff]
        %v185 = vld [vmem:[%s1 + $0x48] sm:$0xff]
        %v186 = vld [vmem:[%s1 + $0x50] sm:$0xff]
        %v187 = vld [vmem:[%s1 + $0x58] sm:$0xff]
        %v188 = vld [vmem:[%s1 + $0x60] sm:$0xff]
        %v189 = vld [vmem:[%s1 + $0x68] sm:$0xff]
        %v190 = vld [vmem:[%s1 + $0x70] sm:$0xff]
        %v191 = vld [vmem:[%s1 + $0x78] sm:$0xff]
        %v192 = vld [vmem:[%s1 + $0x80] sm:$0xff]
        %v193 = vld [vmem:[%s1 + $0x88] sm:$0xff]
        %v194 = vld [vmem:[%s1 + $0x90] sm:$0xff]
        %v195 = vld [vmem:[%s1 + $0x98] sm:$0xff]
        %v196 = vld [vmem:[%s1 + $0xa0] sm:$0xff]
        %v197 = vld [vmem:[%s1 + $0xa8] sm:$0xff]
        %v198 = vld [vmem:[%s1 + $0xb0] sm:$0xff]
        %v199 = vld [vmem:[%s1 + $0xb8] sm:$0xff]
        %v200 = vld [vmem:[%s1 + $0xc0] sm:$0xff]
        %v201 = vld [vmem:[%s1 + $0xc8] sm:$0xff]
        %v202 = vld [vmem:[%s1 + $0xd0] sm:$0xff]
        %v203 = vld [vmem:[%s1 + $0xd8] sm:$0xff]
        %v204 = vld [vmem:[%s1 + $0xe0] sm:$0xff]
        %v205 = vld [vmem:[%s1 + $0xe8] sm:$0xff]
        %v206 = vld [vmem:[%s1 + $0xf0] sm:$0xff]
        %v207 = vld [vmem:[%s1 + $0xf8] sm:$0xff]
        %v208 = vld [vmem:[%s1 + $0x100] sm:$0xff]
        %v209 = vld [vmem:[%s1 + $0x108] sm:$0xff]
        %v210 = vld [vmem:[%s1 + $0x110] sm:$0xff]
        %v211 = vld [vmem:[%s1 + $0x118] sm:$0xff]
        %v212 = vld [vmem:[%s1 + $0x120] sm:$0xff]
        %v213 = vld [vmem:[%s1 + $0x128] sm:$0xff]
        %v214 = vld [vmem:[%s1 + $0x130] sm:$0xff]
        %v215 = vld [vmem:[%s1 + $0x138] sm:$0xff]
        %v216 = vld [vmem:[%s1 + $0x140] sm:$0xff]
        %v217 = vld [vmem:[%s1 + $0x148] sm:$0xff]
        %v218 = vld [vmem:[%s1 + $0x150] sm:$0xff]
        %v219 = vld [vmem:[%s1 + $0x158] sm:$0xff]
        %v220 = vld [vmem:[%s1 + $0x160] sm:$0xff]
        %v221 = vld [vmem:[%s1 + $0x168] sm:$0xff]
        %v222 = vld [vmem:[%s1 + $0x170] sm:$0xff]
        %v223 = vld [vmem:[%s1 + $0x178] sm:$0xff]
        %v224 = vld [vmem:[%s1 + $0x180] sm:$0xff]
        %v225 = vld [vmem:[%s1 + $0x188] sm:$0xff]
        %v226 = vld [vmem:[%s1 + $0x190] sm:$0xff]
        %v227 = vld [vmem:[%s1 + $0x198] sm:$0xff]
        %v228 = vld [vmem:[%s1 + $0x1a0] sm:$0xff]
        %v229 = vld [vmem:[%s1 + $0x1a8] sm:$0xff]
        %v230 = vld [vmem:[%s1 + $0x1b0] sm:$0xff]
        %v231 = vld [vmem:[%s1 + $0x1b8] sm:$0xff]
        %v232 = vld [vmem:[%s1 + $0x1c0] sm:$0xff]
        %v233 = vld [vmem:[%s1 + $0x1c8] sm:$0xff]
        %v234 = vld [vmem:[%s1 + $0x1d0] sm:$0xff]
        %v235 = vld [vmem:[%s1 + $0x1d8] sm:$0xff]
        %v236 = vld [vmem:[%s1 + $0x1e0] sm:$0xff]
        %v237 = vld [vmem:[%s1 + $0x1e8] sm:$0xff]
        %v238 = vld [vmem:[%s1 + $0x1f0] sm:$0xff]
        %v239 = vld [vmem:[%s1 + $0x1f8] sm:$0xff]
        %v240 = vld [vmem:[%s1 + $0x200] sm:$0xff]
        %v241 = vld [vmem:[%s1 + $0x208] sm:$0xff]
        %v242 = vld [vmem:[%s1 + $0x210] sm:$0xff]
        %v243 = vld [vmem:[%s1 + $0x218] sm:$0xff]
        %v244 = vld [vmem:[%s1 + $0x220] sm:$0xff]
        %v245 = vld [vmem:[%s1 + $0x228] sm:$0xff]
        %v246 = vld [vmem:[%s1 + $0x230] sm:$0xff]
        %v247 = vld [vmem:[%s1 + $0x238] sm:$0xff]
        %v248 = vld [vmem:[%s1 + $0x240] sm:$0xff]
        %v249 = vld [vmem:[%s1 + $0x248] sm:$0xff]
        %v250 = vld [vmem:[%s1 + $0x250] sm:$0xff]
        %v251 = vld [vmem:[%s1 + $0x258] sm:$0xff]
        %v252 = vld [vmem:[%s1 + $0x260] sm:$0xff]
        %v253 = vld [vmem:[%s1 + $0x268] sm:$0xff]
        %v254 = vld [vmem:[%s1 + $0x270] sm:$0xff]
        %v255 = vld [vmem:[%s1 + $0x278] sm:$0xff]
        %v256 = vld [vmem:[%s1 + $0x280] sm:$0xff]
        %v257 = vld [vmem:[%s1 + $0x288] sm:$0xff]
        %v258 = vld [vmem:[%s1 + $0x290] sm:$0xff]
        %v259 = vld [vmem:[%s1 + $0x298] sm:$0xff]
        %v260 = vld [vmem:[%s1 + $0x2a0] sm:$0xff]
        %v261 = vld [vmem:[%s1 + $0x2a8] sm:$0xff]
        %v262 = vld [vmem:[%s1 + $0x2b0] sm:$0xff]
        %v263 = vld [vmem:[%s1 + $0x2b8] sm:$0xff]
        %v264 = vld [vmem:[%s1 + $0x2c0] sm:$0xff]
        %v265 = vld [vmem:[%s1 + $0x2c8] sm:$0xff]
        %v266 = vld [vmem:[%s1 + $0x2d0] sm:$0xff]
        %v267 = vld [vmem:[%s1 + $0x2d8] sm:$0xff]
        %v268 = vld [vmem:[%s1 + $0x2e0] sm:$0xff]
        %v269 = vld [vmem:[%s1 + $0x2e8] sm:$0xff]
        %v270 = vld [vmem:[%s1 + $0x2f0] sm:$0xff]
        %v271 = vld [vmem:[%s1 + $0x2f8] sm:$0xff]
        %v272 = vld [vmem:[%s1 + $0x300] sm:$0xff]
        %v273 = vld [vmem:[%s1 + $0x308] sm:$0xff]
        %v274 = vld [vmem:[%s2] sm:$0x1]
        %v276 = vperm.slane %v274, 0
        %vm278 = vcmask 130048
        %v280 = vsel %vm278, %v175, 0
        %282 = vmatpush.msra.mxu0 %v191
        %283 = vmatpush.msra.mxu0 %v190
        %284 = vmatpush.msra.mxu0 %v189
        %285 = vmatpush.msra.mxu0 %v188
        %286 = vmatpush.msra.mxu0 %v187
        %287 = vmatpush.msra.mxu0 %v186
        %288 = vmatpush.msra.mxu0 %v185
        %289 = vmatpush.msra.mxu0 %v184
        %290 = vmatpush.msra.mxu0 %v183
        %291 = vmatpush.msra.mxu0 %v182
        %292 = vmatpush.msra.mxu0 %v181
        %293 = vmatpush.msra.mxu0 %v180
        %294 = vmatpush.msra.mxu0 %v179
        %295 = vmatpush.msra.mxu0 %v178
        %296 = vmatpush.msra.mxu0 %v177
        %297 = vmatpush.msra.mxu0 %v176
        %298 = vmatmul.f32.gmra.mxu0 %v169
        %v299 = vpop.f32.mrf.mxu0
        %v300 = vadd.f32 %v276, %v299
        %301 = vdwg.mxu0
        %302 = vmatpush.msra.mxu0 %v207
        %303 = vmatpush.msra.mxu0 %v206
        %304 = vmatpush.msra.mxu0 %v205
        %305 = vmatpush.msra.mxu0 %v204
        %306 = vmatpush.msra.mxu0 %v203
        %307 = vmatpush.msra.mxu0 %v202
        %308 = vmatpush.msra.mxu0 %v201
        %309 = vmatpush.msra.mxu0 %v200
        %310 = vmatpush.msra.mxu0 %v199
        %311 = vmatpush.msra.mxu0 %v198
        %312 = vmatpush.msra.mxu0 %v197
        %313 = vmatpush.msra.mxu0 %v196
        %314 = vmatpush.msra.mxu0 %v195
        %315 = vmatpush.msra.mxu0 %v194
        %316 = vmatpush.msra.mxu0 %v193
        %317 = vmatpush.msra.mxu0 %v192
        %318 = vmatmul.f32.gmra.mxu0 %v170
        %v319 = vpop.f32.mrf.mxu0
        %v320 = vadd.f32 %v300, %v319
        %321 = vdwg.mxu0
        %322 = vmatpush.msra.mxu0 %v223
        %323 = vmatpush.msra.mxu0 %v222
        %324 = vmatpush.msra.mxu0 %v221
        %325 = vmatpush.msra.mxu0 %v220
        %326 = vmatpush.msra.mxu0 %v219
        %327 = vmatpush.msra.mxu0 %v218
        %328 = vmatpush.msra.mxu0 %v217
        %329 = vmatpush.msra.mxu0 %v216
        %330 = vmatpush.msra.mxu0 %v215
        %331 = vmatpush.msra.mxu0 %v214
        %332 = vmatpush.msra.mxu0 %v213
        %333 = vmatpush.msra.mxu0 %v212
        %334 = vmatpush.msra.mxu0 %v211
        %335 = vmatpush.msra.mxu0 %v210
        %336 = vmatpush.msra.mxu0 %v209
        %337 = vmatpush.msra.mxu0 %v208
        %338 = vmatmul.f32.gmra.mxu0 %v171
        %v339 = vpop.f32.mrf.mxu0
        %v340 = vadd.f32 %v320, %v339
        %341 = vdwg.mxu0
        %342 = vmatpush.msra.mxu0 %v239
        %343 = vmatpush.msra.mxu0 %v238
        %344 = vmatpush.msra.mxu0 %v237
        %345 = vmatpush.msra.mxu0 %v236
        %346 = vmatpush.msra.mxu0 %v235
        %347 = vmatpush.msra.mxu0 %v234
        %348 = vmatpush.msra.mxu0 %v233
        %349 = vmatpush.msra.mxu0 %v232
        %350 = vmatpush.msra.mxu0 %v231
        %351 = vmatpush.msra.mxu0 %v230
        %352 = vmatpush.msra.mxu0 %v229
        %353 = vmatpush.msra.mxu0 %v228
        %354 = vmatpush.msra.mxu0 %v227
        %355 = vmatpush.msra.mxu0 %v226
        %356 = vmatpush.msra.mxu0 %v225
        %357 = vmatpush.msra.mxu0 %v224
        %358 = vmatmul.f32.gmra.mxu0 %v172
        %v359 = vpop.f32.mrf.mxu0
        %v360 = vadd.f32 %v340, %v359
        %361 = vdwg.mxu0
        %362 = vmatpush.msra.mxu0 %v255
        %363 = vmatpush.msra.mxu0 %v254
        %364 = vmatpush.msra.mxu0 %v253
        %365 = vmatpush.msra.mxu0 %v252
        %366 = vmatpush.msra.mxu0 %v251
        %367 = vmatpush.msra.mxu0 %v250
        %368 = vmatpush.msra.mxu0 %v249
        %369 = vmatpush.msra.mxu0 %v248
        %370 = vmatpush.msra.mxu0 %v247
        %371 = vmatpush.msra.mxu0 %v246
        %372 = vmatpush.msra.mxu0 %v245
        %373 = vmatpush.msra.mxu0 %v244
        %374 = vmatpush.msra.mxu0 %v243
        %375 = vmatpush.msra.mxu0 %v242
        %376 = vmatpush.msra.mxu0 %v241
        %377 = vmatpush.msra.mxu0 %v240
        %378 = vmatmul.f32.gmra.mxu0 %v173
        %v379 = vpop.f32.mrf.mxu0
        %v380 = vadd.f32 %v360, %v379
        %381 = vdwg.mxu0
        %382 = vmatpush.msra.mxu0 %v271
        %383 = vmatpush.msra.mxu0 %v270
        %384 = vmatpush.msra.mxu0 %v269
        %385 = vmatpush.msra.mxu0 %v268
        %386 = vmatpush.msra.mxu0 %v267
        %387 = vmatpush.msra.mxu0 %v266
        %388 = vmatpush.msra.mxu0 %v265
        %389 = vmatpush.msra.mxu0 %v264
        %390 = vmatpush.msra.mxu0 %v263
        %391 = vmatpush.msra.mxu0 %v262
        %392 = vmatpush.msra.mxu0 %v261
        %393 = vmatpush.msra.mxu0 %v260
        %394 = vmatpush.msra.mxu0 %v259
        %395 = vmatpush.msra.mxu0 %v258
        %396 = vmatpush.msra.mxu0 %v257
        %397 = vmatpush.msra.mxu0 %v256
        %398 = vmatmul.f32.gmra.mxu0 %v174
        %v399 = vpop.f32.mrf.mxu0
        %v400 = vadd.f32 %v380, %v399
        %401 = vdwg.mxu0
        %402 = vmatpush.msra.mxu0 0.0
        %403 = vmatpush.msra.mxu0 0.0
        %404 = vmatpush.msra.mxu0 0.0
        %405 = vmatpush.msra.mxu0 0.0
        %406 = vmatpush.msra.mxu0 0.0
        %407 = vmatpush.msra.mxu0 0.0
        %408 = vmatpush.msra.mxu0 0.0
        %409 = vmatpush.msra.mxu0 0.0
        %410 = vmatpush.msra.mxu0 0.0
        %411 = vmatpush.msra.mxu0 0.0
        %412 = vmatpush.msra.mxu0 0.0
        %413 = vmatpush.msra.mxu0 0.0
        %414 = vmatpush.msra.mxu0 0.0
        %415 = vmatpush.msra.mxu0 0.0
        %416 = vmatpush.msra.mxu0 %v273
        %417 = vmatpush.msra.mxu0 %v272
        %418 = vmatmul.f32.gmra.mxu0 %v280
        %v419 = vpop.f32.mrf.mxu0
        %v420 = vadd.f32 %v400, %v419
        %421 = vdwg.mxu0
        %vm422 = vcmask 80896
        %423 = vst.msk [vmem:[%s163] sm:$0xff] %vm422, %v420
        %s424 = sand.u32 %s93, 1
        %s425 = scalar_lea.sflag [#allocation3], %s424
        %s426 = sand.u32 %s93, 1
        %s427 = smul.addr %s426, 8
        %s428 = scalar_lea.vmem [#allocation2], %s427
        // Predicated region
        $region33: #{net_forward.1} parent=31 // pred_check
          %p429 = pneg %p103
        $region34: #{net_forward.1} parent=31 // pred_check_branch
          %431 = sbr.rel (%p429) target = $region36
        $region35: #{net_forward.1} parent=31 // pred_region
          %433 = vsyncadd %s425, 0
          %s434 = smul.addr %s17, 8
          %s435 = scalar_lea.hbm %s3, %s434
          %s437 = sshll.u32 %s428, 4
          %s438 = int_to_ptr.vmem [resolvable:$true] %s437
          %s439 = sshll.u32 %s435, 4
          %s440 = int_to_ptr.hbm [resolvable:$true] %s439
          %442 = dma.vmem_to_hbm [thread:$0]  %s438, 128, %s440, %s425
        $region36: #{net_forward.1} parent=31 // pred_fallthru
          _
      $region32: #{net_forward.1} parent=5 // pred_fallthru
        _
      %p443 = scmp.le.s32.totalorder 2, %s12
      // Predicated region
      $region37: #{net_forward.1} parent=5 // pred_check
        %p444 = pneg %p443
      $region38: #{net_forward.1} parent=5 // pred_check_branch
        %446 = sbr.rel (%p444) target = $region40
      $region39: #{net_forward.1} parent=5 // pred_region
        %s447 = ssub.s32 %s12, 2
        // Predicated region
        $region41: #{net_forward.1} parent=39 // pred_check
          %p448 = pneg %p109
        $region42: #{net_forward.1} parent=39 // pred_check_branch
          %450 = sbr.rel (%p448) target = $region44
        $region43: #{net_forward.1} parent=39 // pred_region
          %s451 = sand.u32 %s94, 1
          %s452 = scalar_lea.sflag [#allocation3], %s451
          %s453 = sand.u32 %s94, 1
          %s454 = smul.addr %s453, 8
          %s455 = scalar_lea.vmem [#allocation2], %s454
          %457 = dma.done %s452, 128
        $region44: #{net_forward.1} parent=39 // pred_fallthru
          _
      $region40: #{net_forward.1} parent=5 // pred_fallthru
        _
    $region6: #{net_forward.1} parent=1 // loop_footer
      %s16 = sadd.s32 1, %s12
    $region7: #{net_forward.1} parent=1 // loop_footer_branch
      %11 = sbr.rel target = $region3
    $region8: #{net_forward.1} parent=1 // loop_exit
      _
    %458 = vsyncpa [#allocation3], 1
    %s459 = scalar_lea.sflag [#allocation3], 1
    %460 = vsyncpa %s459, 1

</llo_original>
